<compile_context>
chip_gen: v6e
topology: v6e:2x2x1
jax: 0.10.0
libtpu: 0.0.40
codegen_flags: <defaults>
</compile_context>

<pallas_src>
import jax
import jax.numpy as jnp
from jax.experimental import pallas as pl
from jax.experimental.pallas import tpu as pltpu

HIDDEN = 128   # fixed by the PyTorch module
LANE = 128     # lane width / padded w3 width


def _bc_policy_kernel(x_ref, w1_ref, w23_ref, b_ref, o_ref):
    """x_ref: (TM, S) f32, w1_ref: (S, H) bf16, w23_ref: (2, H, 128) bf16,
    b_ref: (3, 128) f32, o_ref: (TM, A) bf16 with A = action_dim <= 128."""
    a_dim = o_ref.shape[-1]
    x = x_ref[...].astype(jnp.bfloat16)                    # in-kernel cast (no extra XLA pass)
    h1 = jnp.dot(x, w1_ref[...], preferred_element_type=jnp.float32) + b_ref[0:1, :]
    h1 = jnp.maximum(h1, 0.0).astype(jnp.bfloat16)
    h2 = jnp.dot(h1, w23_ref[0], preferred_element_type=jnp.float32) + b_ref[1:2, :]
    h2 = jnp.maximum(h2, 0.0).astype(jnp.bfloat16)
    out = jnp.dot(h2, w23_ref[1], preferred_element_type=jnp.float32) + b_ref[2:3, :]
    # Narrow (lane-masked) store: only the useful action_dim lanes leave VMEM.
    o_ref[...] = jnp.tanh(out[:, :a_dim]).astype(o_ref.dtype)


def bc_policy_forward(x, packed, *, block_m=4096, vmem_budget_bytes=24 * 1024 * 1024):
    """x: (B, state_dim) f32. packed: output of pack_params().
    Returns (B, action_dim) bf16 (tanh output; bf16 costs <4e-3 abs precision)."""
    w1, w23, b = packed["w1"], packed["w23"], packed["b"]
    action_dim = packed["action_dim"]
    B, S = x.shape
    H = w1.shape[1]
    P = w23.shape[2]                       # padded (lane-dense) w3 width

    # Rough per-batch-row VMEM footprint of the streamed/temporary tensors
    # (x f32 double-buffered + h1/h2 in f32 and bf16 + f32 accumulator), used
    # to cap the tile so big state_dims still fit the 32 MiB scoped limit.
    per_row = S * 4 * 2 + H * (4 + 2) * 2 + P * 4
    bm_cap = max(8, (vmem_budget_bytes // per_row) // 8 * 8)
    bm = min(block_m, B, bm_cap)
    if bm < B and bm % 8 != 0:             # (8,128) rule for a non-full batch block
        bm = max(8, (bm // 8) * 8)
    grid = (pl.cdiv(B, bm),)

    flops = 2 * B * (S * H + H * H + H * P)
    bytes_accessed = (x.size * 4 + w1.size * 2 + w23.size * 2 + b.size * 4
                      + B * action_dim * 2)
    cost = pl.CostEstimate(flops=flops, transcendentals=B * P,
                           bytes_accessed=bytes_accessed)

    return pl.pallas_call(
        _bc_policy_kernel,
        out_shape=jax.ShapeDtypeStruct((B, action_dim), jnp.bfloat16),
        grid=grid,
        in_specs=[
            pl.BlockSpec((bm, S), lambda i: (i, 0)),        # x: streamed per batch tile (f32)
            pl.BlockSpec((S, H), lambda i: (0, 0)),         # w1: fetched once, VMEM-resident
            pl.BlockSpec((2, H, P), lambda i: (0, 0, 0)),   # w2/w3 packed, VMEM-resident
            pl.BlockSpec((3, P), lambda i: (0, 0)),         # b1/b2/b3 packed, VMEM-resident
        ],
        out_specs=pl.BlockSpec((bm, action_dim), lambda i: (i, 0)),  # narrow bf16 writeback
        compiler_params=pltpu.CompilerParams(
            dimension_semantics=("parallel",),
            vmem_limit_bytes=32 * 1024 * 1024,
        ),
        cost_estimate=cost,
    )(x, w1, w23, b)


def init_params(key, state_dim, action_dim, hidden=HIDDEN):
    """PyTorch nn.Linear default init (U[-1/sqrt(fan_in), 1/sqrt(fan_in)]), f32, pre-transposed."""
    ks = jax.random.split(key, 6)

    def lin(kw, kb, fan_in, fan_out):
        bound = 1.0 / jnp.sqrt(float(fan_in))
        w = jax.random.uniform(kw, (fan_in, fan_out), jnp.float32, -bound, bound)
        b = jax.random.uniform(kb, (fan_out,), jnp.float32, -bound, bound)
        return w, b

    w1, b1 = lin(ks[0], ks[1], state_dim, hidden)
    w2, b2 = lin(ks[2], ks[3], hidden, hidden)
    w3, b3 = lin(ks[4], ks[5], hidden, action_dim)
    return {"w1": w1, "b1": b1, "w2": w2, "b2": b2, "w3": w3, "b3": b3}


def pack_params(p, pad_to=LANE):
    """Kernel-ready layout: bf16 weights, w3/b3 zero-padded to 128 lanes, packed buffers."""
    hidden, action_dim = p["w3"].shape
    assert hidden == pad_to == HIDDEN, "packing assumes hidden == 128"
    assert action_dim <= pad_to, "action_dim must be <= 128"
    pad = pad_to - action_dim
    w3p = jnp.pad(p["w3"], ((0, 0), (0, pad)))
    b3p = jnp.pad(p["b3"], ((0, pad),))
    return {
        "w1": p["w1"].astype(jnp.bfloat16),                       # (S, 128)
        "w23": jnp.stack([p["w2"], w3p]).astype(jnp.bfloat16),    # (2, 128, 128)
        "b": jnp.stack([p["b1"], p["b2"], b3p]).astype(jnp.float32),  # (3, 128)
        "action_dim": action_dim,
    }


def reference_forward(x, p):
    """Pure-f32 reference matching the PyTorch module."""
    h1 = jnp.maximum(x @ p["w1"] + p["b1"], 0.0)
    h2 = jnp.maximum(h1 @ p["w2"] + p["b2"], 0.0)
    return jnp.tanh(h2 @ p["w3"] + p["b3"])


def reference_forward_bf16(x, p):
    """Reference mirroring the kernel's bf16-operand / f32-accumulate numerics."""
    bf = jnp.bfloat16
    h1 = jnp.dot(x.astype(bf), p["w1"].astype(bf), preferred_element_type=jnp.float32) + p["b1"]
    h1 = jnp.maximum(h1, 0.0).astype(bf)
    h2 = jnp.dot(h1, p["w2"].astype(bf), preferred_element_type=jnp.float32) + p["b2"]
    h2 = jnp.maximum(h2, 0.0).astype(bf)
    out = jnp.dot(h2, p["w3"].astype(bf), preferred_element_type=jnp.float32) + p["b3"]
    return jnp.tanh(out)


if __name__ == "__main__":
    key = jax.random.PRNGKey(0)
    k_params, k_x = jax.random.split(key)

    batch, state_dim, action_dim = 16, 32, 8
    params = init_params(k_params, state_dim, action_dim)
    packed = pack_params(params)
    x = jax.random.normal(k_x, (batch, state_dim), jnp.float32)

    out = jax.block_until_ready(bc_policy_forward(x, packed))
    assert out.shape == (batch, action_dim)
    assert out.dtype == jnp.bfloat16

    out_f32 = out.astype(jnp.float32)
    ref_bf16 = reference_forward_bf16(x, params)   # same operand numerics as the kernel
    ref_f32 = reference_forward(x, params)         # full-precision sanity check
    assert jnp.allclose(out_f32, ref_bf16, atol=8e-3, rtol=0), "mismatch vs bf16-operand reference"
    assert jnp.allclose(out_f32, ref_f32, atol=5e-2, rtol=0), "mismatch vs f32 reference"

    print("KERNEL_OK")
</pallas_src>

<mosaic_0001>
module attributes {stable_mosaic.version = 11 : i64} {
  func.func @_bc_policy_kernel(%arg0: i32, %arg1: memref<16x32xf32, #tpu.memory_space<vmem>>, %arg2: memref<32x128xbf16, #tpu.memory_space<vmem>>, %arg3: memref<2x128x128xbf16, #tpu.memory_space<vmem>>, %arg4: memref<3x128xf32, #tpu.memory_space<vmem>>, %arg5: memref<16x8xbf16, #tpu.memory_space<vmem>>) attributes {dimension_semantics = [#tpu.dimension_semantics<parallel>], iteration_bounds = array<i64: 1>, scalar_prefetch = 0 : i64, scratch_operands = 0 : i64, tpu.core_type = #tpu.core_type<tc>, window_params = [{transform_indices = @transform_0, window_bounds = array<i64: 16, 32>}, {pipeline_mode = #tpu.pipeline_mode<synchronous>, transform_indices = @transform_1, window_bounds = array<i64: 32, 128>}, {pipeline_mode = #tpu.pipeline_mode<synchronous>, transform_indices = @transform_2, window_bounds = array<i64: 2, 128, 128>}, {pipeline_mode = #tpu.pipeline_mode<synchronous>, transform_indices = @transform_3, window_bounds = array<i64: 3, 128>}, {transform_indices = @transform_4, window_bounds = array<i64: 16, 8>}]} {
    %c0 = arith.constant 0 : index
    %c0_0 = arith.constant 0 : index
    %0 = vector.load %arg1[%c0, %c0_0] : memref<16x32xf32, #tpu.memory_space<vmem>>, vector<16x32xf32>
    %1 = arith.truncf %0 : vector<16x32xf32> to vector<16x32xbf16>
    %c0_1 = arith.constant 0 : index
    %c0_2 = arith.constant 0 : index
    %2 = vector.load %arg2[%c0_1, %c0_2] : memref<32x128xbf16, #tpu.memory_space<vmem>>, vector<32x128xbf16>
    %cst = arith.constant dense<0.000000e+00> : vector<16x128xf32>
    %3 = tpu.matmul %1, %2, %cst {dimension_numbers = #tpu.dot_dimension_numbers<[1], [0], [0], [1], [0, 0, 1, 1], [], []>} : vector<16x32xbf16>, vector<32x128xbf16>, vector<16x128xf32> -> vector<16x128xf32>
    %c0_3 = arith.constant 0 : index
    %c0_4 = arith.constant 0 : index
    %4 = vector.load %arg4[%c0_3, %c0_4] : memref<3x128xf32, #tpu.memory_space<vmem>>, vector<1x128xf32>
    %5 = vector.broadcast %4 : vector<1x128xf32> to vector<16x128xf32>
    %6 = arith.addf %3, %5 : vector<16x128xf32>
    %cst_5 = arith.constant 0.000000e+00 : f32
    %7 = vector.broadcast %cst_5 : f32 to vector<16x128xf32>
    %8 = arith.maximumf %6, %7 : vector<16x128xf32>
    %9 = arith.truncf %8 : vector<16x128xf32> to vector<16x128xbf16>
    %c0_6 = arith.constant 0 : index
    %c0_7 = arith.constant 0 : index
    %c0_8 = arith.constant 0 : index
    %10 = vector.load %arg3[%c0_6, %c0_7, %c0_8] : memref<2x128x128xbf16, #tpu.memory_space<vmem>>, vector<1x128x128xbf16>
    %11 = vector.shape_cast %10 : vector<1x128x128xbf16> to vector<128x128xbf16>
    %cst_9 = arith.constant dense<0.000000e+00> : vector<16x128xf32>
    %12 = tpu.matmul %9, %11, %cst_9 {dimension_numbers = #tpu.dot_dimension_numbers<[1], [0], [0], [1], [0, 0, 1, 1], [], []>} : vector<16x128xbf16>, vector<128x128xbf16>, vector<16x128xf32> -> vector<16x128xf32>
    %c1 = arith.constant 1 : index
    %c0_10 = arith.constant 0 : index
    %13 = vector.load %arg4[%c1, %c0_10] : memref<3x128xf32, #tpu.memory_space<vmem>>, vector<1x128xf32>
    %14 = vector.broadcast %13 : vector<1x128xf32> to vector<16x128xf32>
    %15 = arith.addf %12, %14 : vector<16x128xf32>
    %cst_11 = arith.constant 0.000000e+00 : f32
    %16 = vector.broadcast %cst_11 : f32 to vector<16x128xf32>
    %17 = arith.maximumf %15, %16 : vector<16x128xf32>
    %18 = arith.truncf %17 : vector<16x128xf32> to vector<16x128xbf16>
    %c1_12 = arith.constant 1 : index
    %c0_13 = arith.constant 0 : index
    %c0_14 = arith.constant 0 : index
    %19 = vector.load %arg3[%c1_12, %c0_13, %c0_14] : memref<2x128x128xbf16, #tpu.memory_space<vmem>>, vector<1x128x128xbf16>
    %20 = vector.shape_cast %19 : vector<1x128x128xbf16> to vector<128x128xbf16>
    %cst_15 = arith.constant dense<0.000000e+00> : vector<16x128xf32>
    %21 = tpu.matmul %18, %20, %cst_15 {dimension_numbers = #tpu.dot_dimension_numbers<[1], [0], [0], [1], [0, 0, 1, 1], [], []>} : vector<16x128xbf16>, vector<128x128xbf16>, vector<16x128xf32> -> vector<16x128xf32>
    %c2 = arith.constant 2 : index
    %c0_16 = arith.constant 0 : index
    %22 = vector.load %arg4[%c2, %c0_16] : memref<3x128xf32, #tpu.memory_space<vmem>>, vector<1x128xf32>
    %23 = vector.broadcast %22 : vector<1x128xf32> to vector<16x128xf32>
    %24 = arith.addf %21, %23 : vector<16x128xf32>
    %25 = vector.extract_strided_slice %24 {offsets = [0, 0], sizes = [16, 8], strides = [1, 1]} : vector<16x128xf32> to vector<16x8xf32>
    %26 = math.tanh %25 : vector<16x8xf32>
    %27 = arith.truncf %26 : vector<16x8xf32> to vector<16x8xbf16>
    %c0_17 = arith.constant 0 : index
    %c0_18 = arith.constant 0 : index
    %28 = vector.load %arg5[%c0_17, %c0_18] : memref<16x8xbf16, #tpu.memory_space<vmem>>, vector<16x8xbf16>
    tpu.vector_store %arg5[%c0_17, %c0_18], %27 {strides = array<i32>} : memref<16x8xbf16, #tpu.memory_space<vmem>>, vector<16x8xbf16>,
    return
  }
  func.func @transform_0(%arg0: i32) -> (i32, i32) {
    %c0_i32 = arith.constant 0 : i32
    %c0_i32_0 = arith.constant 0 : i32
    return %arg0, %c0_i32 : i32, i32
  }
  func.func @transform_1(%arg0: i32) -> (i32, i32) {
    %c0_i32 = arith.constant 0 : i32
    %c0_i32_0 = arith.constant 0 : i32
    %c0_i32_1 = arith.constant 0 : i32
    return %c0_i32, %c0_i32_0 : i32, i32
  }
  func.func @transform_2(%arg0: i32) -> (i32, i32, i32) {
    %c0_i32 = arith.constant 0 : i32
    %c0_i32_0 = arith.constant 0 : i32
    %c0_i32_1 = arith.constant 0 : i32
    %c0_i32_2 = arith.constant 0 : i32
    return %c0_i32, %c0_i32_0, %c0_i32_1 : i32, i32, i32
  }
  func.func @transform_3(%arg0: i32) -> (i32, i32) {
    %c0_i32 = arith.constant 0 : i32
    %c0_i32_0 = arith.constant 0 : i32
    %c0_i32_1 = arith.constant 0 : i32
    return %c0_i32, %c0_i32_0 : i32, i32
  }
  func.func @transform_4(%arg0: i32) -> (i32, i32) {
    %c0_i32 = arith.constant 0 : i32
    %c0_i32_0 = arith.constant 0 : i32
    return %arg0, %c0_i32 : i32, i32
  }
}

</mosaic_0001>

<llo_original>
// kernel: tpu_custom_call.1
$region0: #{tpu_custom_call.1}
  #allocation0 [shape = 'u32[]', space=smem, size = 0x4, offset = 0x4, fixed_abs, tag = 'smem constant byte address 0x4 - core index']
  #allocation1 [shape = 'u32[144,128]{1,0:T(1,128)}', space=vmem, size = 0x12000, scoped, tag = 'internal scratch']
  %s0 = inlined_call_operand.hbm [shape: f32[16,32], index: 0, kind: input, shape index: {}]
  %s1 = inlined_call_operand.hbm [shape: bf16[32,128], index: 1, kind: input, shape index: {}]
  %s2 = inlined_call_operand.hbm [shape: bf16[2,128,128], index: 2, kind: input, shape index: {}]
  %s3 = inlined_call_operand.vmem [shape: f32[3,128], index: 3, kind: input, shape index: {}]
  %s4 = inlined_call_operand.vmem [shape: bf16[16,8], index: 4, kind: output, shape index: {}]
  %s5 = sld [smem:[#allocation0]]
  $region38: #{tpu_custom_call.1} parent=0
    _
  %s7 = ssub.s32 1, %s5
  %s8 = scalar_select 0, %s7, %s5
  $region1: #{tpu_custom_call.1} parent=0
    #allocation2 [shape = 'u8[8192]{0}', space=vmem, size = 0x2000, scoped, tag = 'input window, operand 0, single buffered']
    #allocation3 [shape = 's32[1]{0}', space=sflag, size = 0x4, scoped, tag = 'scoped memory for tpu_custom_call.1']
    #allocation4 [shape = 'u8[8192]{0}', space=vmem, size = 0x2000, scoped, tag = 'input window, operand 1, single buffered']
    #allocation5 [shape = 's32[1]{0}', space=sflag, size = 0x4, scoped, tag = 'scoped memory for tpu_custom_call.1']
    #allocation6 [shape = 'u8[65536]{0}', space=vmem, size = 0x10000, scoped, tag = 'input window, operand 2, single buffered']
    %9 = vsyncpa [#allocation3], 0
    %10 = vsyncpa [#allocation5], 0
    // Predicated region
    $region2: #{tpu_custom_call.1} parent=1 // pred_check
      _
    $region3: #{tpu_custom_call.1} parent=1 // pred_check_branch
      %12 = sbr.rel (0) target = $region5
    $region4: #{tpu_custom_call.1} parent=1 // pred_region
      %s14 = ssub.s32 256, 256
      %15 = vsyncadd [#allocation3], %s14
      %s16 = sshll.u32 [#allocation2], 4
      %s17 = int_to_ptr.vmem [resolvable:$true] %s16
      %22 = dma.hbm_to_vmem [thread:$0]  %s0, 256, %s17, [#allocation3], 128, 128, 8
    $region5: #{tpu_custom_call.1} parent=1 // pred_fallthru
      _
    // Predicated region
    $region6: #{tpu_custom_call.1} parent=1 // pred_check
      _
    $region7: #{tpu_custom_call.1} parent=1 // pred_check_branch
      %24 = sbr.rel (0) target = $region9
    $region8: #{tpu_custom_call.1} parent=1 // pred_region
      %s26 = ssub.s32 256, 256
      %27 = vsyncadd [#allocation5], %s26
      %s28 = sshll.u32 [#allocation4], 4
      %s29 = int_to_ptr.vmem [resolvable:$true] %s28
      %34 = dma.hbm_to_vmem [thread:$0]  %s1, 256, %s29, [#allocation5], 64, 64, 4
    $region9: #{tpu_custom_call.1} parent=1 // pred_fallthru
      _
    // Predicated region
    $region10: #{tpu_custom_call.1} parent=1 // pred_check
      _
    $region11: #{tpu_custom_call.1} parent=1 // pred_check_branch
      %36 = sbr.rel (0) target = $region13
    $region12: #{tpu_custom_call.1} parent=1 // pred_region
      %s38 = ssub.s32 2048, 2048
      %39 = vsyncadd [#allocation5], %s38
      %s40 = sshll.u32 [#allocation6], 4
      %s41 = int_to_ptr.vmem [resolvable:$true] %s40
      %46 = dma.hbm_to_vmem [thread:$0]  %s2, 2048, %s41, [#allocation5], 64, 64, 4
    $region13: #{tpu_custom_call.1} parent=1 // pred_fallthru
      _
    // Predicated region
    $region14: #{tpu_custom_call.1} parent=1 // pred_check
      _
    $region15: #{tpu_custom_call.1} parent=1 // pred_check_branch
      %48 = sbr.rel (0) target = $region17
    $region16: #{tpu_custom_call.1} parent=1 // pred_region
      _
    $region17: #{tpu_custom_call.1} parent=1 // pred_fallthru
      _
    // Predicated region
    $region18: #{tpu_custom_call.1} parent=1 // pred_check
      _
    $region19: #{tpu_custom_call.1} parent=1 // pred_check_branch
      %50 = sbr.rel (0) target = $region21
    $region20: #{tpu_custom_call.1} parent=1 // pred_region
      %51 = dma.done [#allocation3], 256
    $region21: #{tpu_custom_call.1} parent=1 // pred_fallthru
      _
    // Predicated region
    $region22: #{tpu_custom_call.1} parent=1 // pred_check
      _
    $region23: #{tpu_custom_call.1} parent=1 // pred_check_branch
      %53 = sbr.rel (0) target = $region25
    $region24: #{tpu_custom_call.1} parent=1 // pred_region
      %54 = dma.done [#allocation5], 256
    $region25: #{tpu_custom_call.1} parent=1 // pred_fallthru
      _
    // Predicated region
    $region26: #{tpu_custom_call.1} parent=1 // pred_check
      _
    $region27: #{tpu_custom_call.1} parent=1 // pred_check_branch
      %56 = sbr.rel (0) target = $region29
    $region28: #{tpu_custom_call.1} parent=1 // pred_region
      %57 = dma.done [#allocation5], 2048
    $region29: #{tpu_custom_call.1} parent=1 // pred_fallthru
      _
    %v59 = vld [vmem:[#allocation2] sm:$0xff]
    %v60 = vld [vmem:[#allocation2 + $0x8] sm:$0xff]
    %v61 = vpack.c.bf16 %v60, %v59
    %v62 = vld [vmem:[#allocation4] sm:$0xf]
    %v63 = vld [vmem:[#allocation4 + $0x4] sm:$0xf]
    %v64 = vld [vmem:[#allocation4 + $0x8] sm:$0xf]
    %v65 = vld [vmem:[#allocation4 + $0xc] sm:$0xf]
    %v66 = vld [vmem:[%s3] sm:$0x1]
    %v67 = vlaneseq
    %v68 = vshrl.u32 %v67, 7
    %v69 = vsub.s32 0, %v68
    %v70 = vrot.slane %v66, %v69
    %v75 = vunpack.c.l.b16 %v62
    %v76 = vunpack.c.l.b16 %v63
    %v77 = vunpack.c.l.b16 %v64
    %v78 = vunpack.c.l.b16 %v65
    %v79 = vpack.c.b16 %v76, %v75
    %v80 = vpack.c.b16 %v78, %v77
    %vm83 = vcmask 261120
    %v85 = vsel %vm83, %v61, 0
    %87 = vmatprep.subr.bf16.mxu0 0
    %88 = vmatpush1.bf16.msra.mxu0 0
    %89 = vmatprep.subr.bf16.mxu0 0
    %90 = vmatpush1.bf16.msra.mxu0 0
    %91 = vmatprep.subr.bf16.mxu0 0
    %92 = vmatpush1.bf16.msra.mxu0 0
    %93 = vmatprep.subr.bf16.mxu0 0
    %94 = vmatpush1.bf16.msra.mxu0 0
    %95 = vmatprep.subr.bf16.mxu0 0
    %96 = vmatpush1.bf16.msra.mxu0 0
    %97 = vmatprep.subr.bf16.mxu0 0
    %98 = vmatpush1.bf16.msra.mxu0 0
    %99 = vmatprep.subr.bf16.mxu0 0
    %100 = vmatpush1.bf16.msra.mxu0 %v80
    %101 = vmatprep.subr.bf16.mxu0 0
    %102 = vmatpush1.bf16.msra.mxu0 %v79
    %103 = vmatprep.subr.bf16.mxu0 0
    %104 = vmatpush2.bf16.msra.mxu0 0
    %105 = vmatprep.subr.bf16.mxu0 0
    %106 = vmatpush2.bf16.msra.mxu0 0
    %107 = vmatprep.subr.bf16.mxu0 0
    %108 = vmatpush2.bf16.msra.mxu0 0
    %109 = vmatprep.subr.bf16.mxu0 0
    %110 = vmatpush2.bf16.msra.mxu0 0
    %111 = vmatprep.subr.bf16.mxu0 0
    %112 = vmatpush2.bf16.msra.mxu0 0
    %113 = vmatprep.subr.bf16.mxu0 0
    %114 = vmatpush2.bf16.msra.mxu0 0
    %115 = vmatprep.subr.bf16.mxu0 0
    %116 = vmatpush2.bf16.msra.mxu0 0
    %117 = vmatprep.subr.bf16.mxu0 0
    %118 = vmatpush2.bf16.msra.mxu0 0
    %119 = vmatprep.mubr.bf16.mxu0 0
    %120 = vmatmul.mubr.bf16.gmra.mxu0 %v85
    %v121 = vpop.f32.mrf.mxu0
    %v122 = vadd.f32 %v70, %v121
    %v123 = vpop.f32.mrf.mxu0
    %v124 = vpop.f32.mrf.mxu0
    %v125 = vadd.f32 %v70, %v124
    %v126 = vpop.f32.mrf.mxu0
    %127 = vdwg.mxu0
    %v128 = vmax.f32 %v122, 0.0
    %v129 = vmax.f32 %v125, 0.0
    %v130 = vpack.c.bf16 %v129, %v128
    %v131 = vld [vmem:[#allocation6] sm:$0xf]
    %v132 = vld [vmem:[#allocation6 + $0x4] sm:$0xf]
    %v133 = vld [vmem:[#allocation6 + $0x8] sm:$0xf]
    %v134 = vld [vmem:[#allocation6 + $0xc] sm:$0xf]
    %v135 = vld [vmem:[#allocation6 + $0x10] sm:$0xf]
    %v136 = vld [vmem:[#allocation6 + $0x14] sm:$0xf]
    %v137 = vld [vmem:[#allocation6 + $0x18] sm:$0xf]
    %v138 = vld [vmem:[#allocation6 + $0x1c] sm:$0xf]
    %v139 = vld [vmem:[#allocation6 + $0x20] sm:$0xf]
    %v140 = vld [vmem:[#allocation6 + $0x24] sm:$0xf]
    %v141 = vld [vmem:[#allocation6 + $0x28] sm:$0xf]
    %v142 = vld [vmem:[#allocation6 + $0x2c] sm:$0xf]
    %v143 = vld [vmem:[#allocation6 + $0x30] sm:$0xf]
    %v144 = vld [vmem:[#allocation6 + $0x34] sm:$0xf]
    %v145 = vld [vmem:[#allocation6 + $0x38] sm:$0xf]
    %v146 = vld [vmem:[#allocation6 + $0x3c] sm:$0xf]
    %v147 = vld [vmem:[%s3 + $0x1] sm:$0x1]
    %v148 = vlaneseq
    %v149 = vshrl.u32 %v148, 7
    %v150 = vsub.s32 0, %v149
    %v151 = vrot.slane %v147, %v150
    %v168 = vunpack.c.l.b16 %v131
    %v169 = vunpack.c.l.b16 %v132
    %v170 = vunpack.c.l.b16 %v133
    %v171 = vunpack.c.l.b16 %v134
    %v172 = vunpack.c.l.b16 %v135
    %v173 = vunpack.c.l.b16 %v136
    %v174 = vunpack.c.l.b16 %v137
    %v175 = vunpack.c.l.b16 %v138
    %v176 = vunpack.c.l.b16 %v139
    %v177 = vunpack.c.l.b16 %v140
    %v178 = vunpack.c.l.b16 %v141
    %v179 = vunpack.c.l.b16 %v142
    %v180 = vunpack.c.l.b16 %v143
    %v181 = vunpack.c.l.b16 %v144
    %v182 = vunpack.c.l.b16 %v145
    %v183 = vunpack.c.l.b16 %v146
    %v184 = vpack.c.b16 %v169, %v168
    %v185 = vpack.c.b16 %v171, %v170
    %v186 = vpack.c.b16 %v173, %v172
    %v187 = vpack.c.b16 %v175, %v174
    %v188 = vpack.c.b16 %v177, %v176
    %v189 = vpack.c.b16 %v179, %v178
    %v190 = vpack.c.b16 %v181, %v180
    %v191 = vpack.c.b16 %v183, %v182
    %200 = vmatprep.subr.bf16.mxu0 0
    %201 = vmatpush1.bf16.msra.mxu0 %v191
    %202 = vmatprep.subr.bf16.mxu0 0
    %203 = vmatpush1.bf16.msra.mxu0 %v190
    %204 = vmatprep.subr.bf16.mxu0 0
    %205 = vmatpush1.bf16.msra.mxu0 %v189
    %206 = vmatprep.subr.bf16.mxu0 0
    %207 = vmatpush1.bf16.msra.mxu0 %v188
    %208 = vmatprep.subr.bf16.mxu0 0
    %209 = vmatpush1.bf16.msra.mxu0 %v187
    %210 = vmatprep.subr.bf16.mxu0 0
    %211 = vmatpush1.bf16.msra.mxu0 %v186
    %212 = vmatprep.subr.bf16.mxu0 0
    %213 = vmatpush1.bf16.msra.mxu0 %v185
    %214 = vmatprep.subr.bf16.mxu0 0
    %215 = vmatpush1.bf16.msra.mxu0 %v184
    %216 = vmatprep.subr.bf16.mxu0 0
    %217 = vmatpush2.bf16.msra.mxu0 0
    %218 = vmatprep.subr.bf16.mxu0 0
    %219 = vmatpush2.bf16.msra.mxu0 0
    %220 = vmatprep.subr.bf16.mxu0 0
    %221 = vmatpush2.bf16.msra.mxu0 0
    %222 = vmatprep.subr.bf16.mxu0 0
    %223 = vmatpush2.bf16.msra.mxu0 0
    %224 = vmatprep.subr.bf16.mxu0 0
    %225 = vmatpush2.bf16.msra.mxu0 0
    %226 = vmatprep.subr.bf16.mxu0 0
    %227 = vmatpush2.bf16.msra.mxu0 0
    %228 = vmatprep.subr.bf16.mxu0 0
    %229 = vmatpush2.bf16.msra.mxu0 0
    %230 = vmatprep.subr.bf16.mxu0 0
    %231 = vmatpush2.bf16.msra.mxu0 0
    %232 = vmatprep.mubr.bf16.mxu0 0
    %233 = vmatmul.mubr.bf16.gmra.mxu0 %v130
    %v234 = vpop.f32.mrf.mxu0
    %v235 = vadd.f32 %v151, %v234
    %v236 = vpop.f32.mrf.mxu0
    %v237 = vpop.f32.mrf.mxu0
    %v238 = vadd.f32 %v151, %v237
    %v239 = vpop.f32.mrf.mxu0
    %240 = vdwg.mxu0
    %v241 = vmax.f32 %v235, 0.0
    %v242 = vmax.f32 %v238, 0.0
    %v243 = vpack.c.bf16 %v242, %v241
    %s244 = scalar_lea.vmem [#allocation6], 64
    %v245 = vld [vmem:[%s244] sm:$0xf]
    %v246 = vld [vmem:[%s244 + $0x4] sm:$0xf]
    %v247 = vld [vmem:[%s244 + $0x8] sm:$0xf]
    %v248 = vld [vmem:[%s244 + $0xc] sm:$0xf]
    %v249 = vld [vmem:[%s244 + $0x10] sm:$0xf]
    %v250 = vld [vmem:[%s244 + $0x14] sm:$0xf]
    %v251 = vld [vmem:[%s244 + $0x18] sm:$0xf]
    %v252 = vld [vmem:[%s244 + $0x1c] sm:$0xf]
    %v253 = vld [vmem:[%s244 + $0x20] sm:$0xf]
    %v254 = vld [vmem:[%s244 + $0x24] sm:$0xf]
    %v255 = vld [vmem:[%s244 + $0x28] sm:$0xf]
    %v256 = vld [vmem:[%s244 + $0x2c] sm:$0xf]
    %v257 = vld [vmem:[%s244 + $0x30] sm:$0xf]
    %v258 = vld [vmem:[%s244 + $0x34] sm:$0xf]
    %v259 = vld [vmem:[%s244 + $0x38] sm:$0xf]
    %v260 = vld [vmem:[%s244 + $0x3c] sm:$0xf]
    %v261 = vld [vmem:[%s3 + $0x2] sm:$0x1]
    %v262 = vlaneseq
    %v263 = vshrl.u32 %v262, 7
    %v264 = vsub.s32 0, %v263
    %v265 = vrot.slane %v261, %v264
    %v282 = vunpack.c.l.b16 %v245
    %v283 = vunpack.c.l.b16 %v246
    %v284 = vunpack.c.l.b16 %v247
    %v285 = vunpack.c.l.b16 %v248
    %v286 = vunpack.c.l.b16 %v249
    %v287 = vunpack.c.l.b16 %v250
    %v288 = vunpack.c.l.b16 %v251
    %v289 = vunpack.c.l.b16 %v252
    %v290 = vunpack.c.l.b16 %v253
    %v291 = vunpack.c.l.b16 %v254
    %v292 = vunpack.c.l.b16 %v255
    %v293 = vunpack.c.l.b16 %v256
    %v294 = vunpack.c.l.b16 %v257
    %v295 = vunpack.c.l.b16 %v258
    %v296 = vunpack.c.l.b16 %v259
    %v297 = vunpack.c.l.b16 %v260
    %v298 = vpack.c.b16 %v283, %v282
    %v299 = vpack.c.b16 %v285, %v284
    %v300 = vpack.c.b16 %v287, %v286
    %v301 = vpack.c.b16 %v289, %v288
    %v302 = vpack.c.b16 %v291, %v290
    %v303 = vpack.c.b16 %v293, %v292
    %v304 = vpack.c.b16 %v295, %v294
    %v305 = vpack.c.b16 %v297, %v296
    %314 = vmatprep.subr.bf16.mxu0 0
    %315 = vmatpush1.bf16.msra.mxu0 %v305
    %316 = vmatprep.subr.bf16.mxu0 0
    %317 = vmatpush1.bf16.msra.mxu0 %v304
    %318 = vmatprep.subr.bf16.mxu0 0
    %319 = vmatpush1.bf16.msra.mxu0 %v303
    %320 = vmatprep.subr.bf16.mxu0 0
    %321 = vmatpush1.bf16.msra.mxu0 %v302
    %322 = vmatprep.subr.bf16.mxu0 0
    %323 = vmatpush1.bf16.msra.mxu0 %v301
    %324 = vmatprep.subr.bf16.mxu0 0
    %325 = vmatpush1.bf16.msra.mxu0 %v300
    %326 = vmatprep.subr.bf16.mxu0 0
    %327 = vmatpush1.bf16.msra.mxu0 %v299
    %328 = vmatprep.subr.bf16.mxu0 0
    %329 = vmatpush1.bf16.msra.mxu0 %v298
    %330 = vmatprep.subr.bf16.mxu0 0
    %331 = vmatpush2.bf16.msra.mxu0 0
    %332 = vmatprep.subr.bf16.mxu0 0
    %333 = vmatpush2.bf16.msra.mxu0 0
    %334 = vmatprep.subr.bf16.mxu0 0
    %335 = vmatpush2.bf16.msra.mxu0 0
    %336 = vmatprep.subr.bf16.mxu0 0
    %337 = vmatpush2.bf16.msra.mxu0 0
    %338 = vmatprep.subr.bf16.mxu0 0
    %339 = vmatpush2.bf16.msra.mxu0 0
    %340 = vmatprep.subr.bf16.mxu0 0
    %341 = vmatpush2.bf16.msra.mxu0 0
    %342 = vmatprep.subr.bf16.mxu0 0
    %343 = vmatpush2.bf16.msra.mxu0 0
    %344 = vmatprep.subr.bf16.mxu0 0
    %345 = vmatpush2.bf16.msra.mxu0 0
    %346 = vmatprep.mubr.bf16.mxu0 0
    %347 = vmatmul.mubr.bf16.gmra.mxu0 %v243
    %v348 = vpop.f32.mrf.mxu0
    %v349 = vadd.f32 %v265, %v348
    %v350 = vpop.f32.mrf.mxu0
    %v351 = vpop.f32.mrf.mxu0
    %v352 = vadd.f32 %v265, %v351
    %v353 = vpop.f32.mrf.mxu0
    %354 = vdwg.mxu0
    %v355 = vtanh.pop %v349
    %v356 = vtanh.pop %v352
    %v357 = vpack.c.bf16 %v356, %v355
    %v359 = vunpack.c.l.b16 %v357
    %v360 = vunpack.c.h.b16 %v357
    %v361 = vpack.c.b16 %v359, %v359
    %v362 = vpack.c.b16 %v360, %v360
    %vm365 = vcmask 60416
    %366 = vst.msk [vmem:[%s4] sm:$0xf] %vm365, %v361
    %367 = vst.msk [vmem:[%s4 + $0x4] sm:$0xf] %vm365, %v362
    // Predicated region
    $region30: #{tpu_custom_call.1} parent=1 // pred_check
      _
    $region31: #{tpu_custom_call.1} parent=1 // pred_check_branch
      %369 = sbr.rel (0) target = $region33
    $region32: #{tpu_custom_call.1} parent=1 // pred_region
      _
    $region33: #{tpu_custom_call.1} parent=1 // pred_fallthru
      _
    // Predicated region
    $region34: #{tpu_custom_call.1} parent=1 // pred_check
      _
    $region35: #{tpu_custom_call.1} parent=1 // pred_check_branch
      %371 = sbr.rel (0) target = $region37
    $region36: #{tpu_custom_call.1} parent=1 // pred_region
      _
    $region37: #{tpu_custom_call.1} parent=1 // pred_fallthru
      _
    %372 = vsyncpa [#allocation3], 1
    %373 = vsyncpa [#allocation5], 1

</llo_original>
